<compile_context>
chip_gen: v7x
topology: tpu7x:2x2x1
jax: 0.10.0
libtpu: 0.0.40
codegen_flags: <defaults>
</compile_context>

<pallas_src>
import functools

import jax
import jax.numpy as jnp
import numpy as np
from jax import lax
from jax.experimental import pallas as pl
from jax.experimental.pallas import tpu as pltpu

_MIB = 1024 * 1024


# ---------------------------------------------------------------------------
# Kernels
# ---------------------------------------------------------------------------
def _duc_kernel(x_ref, o_ref, acc_ref, *, sx, sy, cb, cdt):
    """DUC / depth-to-space, sy > 1.

    x_ref:   (1, cb*sx, sy, H, W)   input channels, split by j (free reshape)
    o_ref:   (1, cb, H, sx*W*sy)    lanes ordered (i, w, j); free wrapper
                                    reshape turns this into (cb, H*sx, W*sy)
    acc_ref: (cb, sx, H, W*sy)      VMEM accumulator (output dtype, exact)
    """
    H, W = x_ref.shape[3], x_ref.shape[4]
    OW = W * sy

    # Exact 0/1 lane-interleave selectors: S_j[w, w*sy + j] = 1.
    w_i = lax.broadcasted_iota(jnp.int32, (W, OW), 0)
    c_i = lax.broadcasted_iota(jnp.int32, (W, OW), 1)

    for j in range(sy):                                   # sy is tiny: unrolled
        s_j = (c_i == w_i * sy + j).astype(cdt)
        # One matmul batched over (channel, i, h): (cb*sx*H, W) @ (W, OW).
        pj = x_ref[0, :, j].astype(cdt).reshape(cb * sx * H, W)
        yj = jnp.dot(pj, s_j, preferred_element_type=cdt)
        yj = yj.astype(acc_ref.dtype).reshape(cb, sx, H, OW)
        if j == 0:
            acc_ref[...] = yj
        else:
            acc_ref[...] += yj                            # disjoint cols -> exact

    # Row interleave is pure layout: sub-row i goes to lane offset i*OW.
    def _store(c, carry):
        for i in range(sx):
            o_ref[0, c, :, pl.ds(i * OW, OW)] = acc_ref[c, i]
        return carry

    lax.fori_loop(0, cb, _store, 0)


def _duc_copy_kernel(x_ref, o_ref, *, sx, cb):
    """DUC with sy == 1: pure data movement (no MXU)."""
    W = x_ref.shape[4]

    def _store(c, carry):
        for i in range(sx):
            o_ref[0, c, :, pl.ds(i * W, W)] = x_ref[0, c * sx + i, 0]
        return carry

    lax.fori_loop(0, cb, _store, 0)


def _tc2d_kernel(x_ref, o_ref, *, sx, sy, cb, cdt):
    """TC2D / space-to-depth.

    x_ref: (1, cb, OH, sx*W)        rows split by i (free wrapper reshape)
    o_ref: (1, cb, sx, sy, OH, OW)  free wrapper reshape -> (cb*sx*sy, OH, OW)
    """
    OH = x_ref.shape[2]
    W = x_ref.shape[3] // sx
    OW = W // sy

    if sy > 1:
        # Exact 0/1 lane de-interleave selectors: T_j[ow*sy + j, ow] = 1.
        w_i = lax.broadcasted_iota(jnp.int32, (W, OW), 0)
        ow_i = lax.broadcasted_iota(jnp.int32, (W, OW), 1)
        t_sel = [(w_i == ow_i * sy + j).astype(cdt) for j in range(sy)]

    for i in range(sx):                                   # sx, sy tiny: unrolled
        plane = x_ref[0, :, :, pl.ds(i * W, W)]           # (cb, OH, W)
        if sy == 1:
            o_ref[0, :, i, 0] = plane                     # pure copy
        else:
            pm = plane.astype(cdt).reshape(cb * OH, W)    # batch over (c, oh)
            for j in range(sy):
                out_ij = jnp.dot(pm, t_sel[j], preferred_element_type=cdt)
                o_ref[0, :, i, j] = out_ij.astype(o_ref.dtype).reshape(cb, OH, OW)


# ---------------------------------------------------------------------------
# Wrapper
# ---------------------------------------------------------------------------
def _largest_divisor_leq(n, cap):
    cap = int(max(1, min(n, cap)))
    for d in range(cap, 0, -1):
        if n % d == 0:
            return d
    return 1


def _vmem_budgets():
    """Returns (data_budget_bytes, vmem_limit_bytes), sized per generation."""
    try:
        phys = int(pltpu.get_tpu_info().vmem_capacity_bytes)
    except Exception:
        phys = 64 * _MIB                      # conservative (v7x-sized) fallback
    vmem_limit = max(32 * _MIB, min(3 * phys // 4, 96 * _MIB))
    data_budget = max(8 * _MIB, min(phys // 2 - 8 * _MIB, 56 * _MIB))
    return data_budget, vmem_limit


def pixel_shuffle_2d(x, scale_factor, is_reverse=False):
    if isinstance(scale_factor, int):
        sx = sy = int(scale_factor)
    elif isinstance(scale_factor, (tuple, list)):
        sx, sy = int(scale_factor[0]), int(scale_factor[1])
    else:
        raise ValueError("scale factor should be int or tuple or list")

    B, C, H, W = x.shape
    G = sx * sy
    isz = jnp.dtype(x.dtype).itemsize
    cdt = x.dtype if jnp.issubdtype(x.dtype, jnp.floating) else jnp.float32
    cs = jnp.dtype(cdt).itemsize
    data_budget, vmem_limit = _vmem_budgets()

    if is_reverse:  # -------- TC2D / space-to-depth --------
        assert H % sx == 0 and W % sy == 0
        OH, OW = H // sx, W // sy
        out_c = C * G
        # per-input-channel: double-buffered in+out blocks + dot temporaries
        per_c = H * W * 4 * isz + OH * (W + OW) * (cs + isz)
        sel_bytes = sy * W * OW * cs
        cap = max(1, (data_budget - sel_bytes) // per_c)
        if B == 1 and C > 1:
            cap = min(cap, max(1, C // 2))    # keep >=2 parallel steps (v7x)
        cb = _largest_divisor_leq(C, cap)

        x_in = x.reshape(B, C, OH, sx * W)    # free: (oh*sx+i)*W+w == oh*sx*W+i*W+w
        kernel = functools.partial(_tc2d_kernel, sx=sx, sy=sy, cb=cb, cdt=cdt)
        grid = (B, C // cb)
        in_specs = [pl.BlockSpec((1, cb, OH, sx * W), lambda b, c: (b, c, 0, 0))]
        out_shape = jax.ShapeDtypeStruct((B, C, sx, sy, OH, OW), x.dtype)
        out_specs = pl.BlockSpec((1, cb, sx, sy, OH, OW),
                                 lambda b, c: (b, c, 0, 0, 0, 0))
        scratch_shapes = []
        flops = 0 if sy == 1 else 2 * B * C * H * W * OW
        final = lambda y: y.reshape(B, out_c, OH, OW)          # free
    else:           # -------- DUC / depth-to-space --------
        assert C % G == 0
        out_c = C // G
        OW = W * sy
        # per-output-channel: double-buffered in+out + scratch + dot temporaries
        per_c = G * H * W * 5 * isz + sx * H * W * (1 + sy) * cs
        sel_bytes = sy * W * OW * cs
        cap = max(1, (data_budget - sel_bytes) // per_c)
        if B == 1 and out_c > 1:
            cap = min(cap, max(1, out_c // 2))
        cb = _largest_divisor_leq(out_c, cap)

        x_in = x.reshape(B, out_c * sx, sy, H, W)              # free channel split
        grid = (B, out_c // cb)
        in_specs = [pl.BlockSpec((1, cb * sx, sy, H, W),
                                 lambda b, c: (b, c, 0, 0, 0))]
        out_shape = jax.ShapeDtypeStruct((B, out_c, H, sx * OW), x.dtype)
        out_specs = pl.BlockSpec((1, cb, H, sx * OW), lambda b, c: (b, c, 0, 0))
        if sy > 1:
            kernel = functools.partial(_duc_kernel, sx=sx, sy=sy, cb=cb, cdt=cdt)
            scratch_shapes = [pltpu.VMEM((cb, sx, H, OW), x.dtype)]
            flops = 2 * B * C * H * W * OW
        else:
            kernel = functools.partial(_duc_copy_kernel, sx=sx, cb=cb)
            scratch_shapes = []
            flops = 0
        final = lambda y: y.reshape(B, out_c, H * sx, OW)      # free

    y = pl.pallas_call(
        kernel,
        out_shape=out_shape,
        grid=grid,
        in_specs=in_specs,
        out_specs=out_specs,
        scratch_shapes=scratch_shapes,
        compiler_params=pltpu.CompilerParams(
            dimension_semantics=("parallel", "parallel"),
            vmem_limit_bytes=int(vmem_limit)),
        cost_estimate=pl.CostEstimate(flops=int(flops), transcendentals=0,
                                      bytes_accessed=int(2 * x.size * isz)),
    )(x_in)
    return final(y)


# ---------------------------------------------------------------------------
# Pure-JAX reference (mirrors the PyTorch forward exactly)
# ---------------------------------------------------------------------------
def pixel_shuffle_2d_ref(x, scale_factor, is_reverse=False):
    if isinstance(scale_factor, int):
        sx = sy = scale_factor
    else:
        sx, sy = scale_factor
    B, C, H, W = x.shape
    if is_reverse:
        oh, ow = H // sx, W // sy
        v = x.reshape(B, C, oh, sx, ow, sy)
        return jnp.transpose(v, (0, 1, 3, 5, 2, 4)).reshape(B, C * sx * sy, oh, ow)
    else:
        c_out = C // (sx * sy)
        v = x.reshape(B, c_out, sx, sy, H, W)
        return jnp.transpose(v, (0, 1, 4, 2, 5, 3)).reshape(B, c_out, H * sx, W * sy)


# ---------------------------------------------------------------------------
if __name__ == "__main__":
    key = jax.random.PRNGKey(0)
    x = jax.random.normal(key, (2, 4, 16, 16), dtype=jnp.float32)

    # Square scale, both directions (PixelShuffle2D(scale_factor=2)).
    #   DUC : (2, 4, 16, 16) -> (2, 1, 32, 32)
    #   TC2D: (2, 4, 16, 16) -> (2, 16, 8, 8)
    for is_rev in (False, True):
        y = pixel_shuffle_2d(x, 2, is_reverse=is_rev)
        jax.block_until_ready(y)
        y_ref = pixel_shuffle_2d_ref(x, 2, is_reverse=is_rev)
        np.testing.assert_allclose(np.asarray(y), np.asarray(y_ref),
                                   rtol=1e-6, atol=1e-6)

    # Anisotropic scales exercise the sx == 1 / sy == 1 paths in both kernels.
    for scale, is_rev in (((2, 1), False), ((1, 2), True),
                          ((1, 2), False), ((2, 1), True)):
        y = pixel_shuffle_2d(x, scale, is_reverse=is_rev)
        jax.block_until_ready(y)
        y_ref = pixel_shuffle_2d_ref(x, scale, is_reverse=is_rev)
        np.testing.assert_allclose(np.asarray(y), np.asarray(y_ref),
                                   rtol=1e-6, atol=1e-6)

    print("KERNEL_OK")
</pallas_src>

<mosaic_0001>
module attributes {stable_mosaic.version = 11 : i64} {
  func.func @_duc_kernel(%arg0: i32, %arg1: i32, %arg2: memref<1x2x2x16x16xf32, #tpu.memory_space<vmem>>, %arg3: memref<1x1x16x64xf32, #tpu.memory_space<vmem>>, %arg4: memref<1x2x16x32xf32, #tpu.memory_space<vmem>>) attributes {dimension_semantics = [#tpu.dimension_semantics<parallel>, #tpu.dimension_semantics<parallel>], iteration_bounds = array<i64: 2, 1>, scalar_prefetch = 0 : i64, scratch_operands = 1 : i64, tpu.core_type = #tpu.core_type<tc>, window_params = [{transform_indices = @transform_0, window_bounds = array<i64: 1, 2, 2, 16, 16>}, {transform_indices = @transform_1, window_bounds = array<i64: 1, 1, 16, 64>}]} {
    %0 = tpu.iota {dimensions = array<i32: 0>} : vector<16x32xi32>
    %1 = tpu.iota {dimensions = array<i32: 1>} : vector<16x32xi32>
    %c2_i32 = arith.constant 2 : i32
    %2 = vector.broadcast %c2_i32 : i32 to vector<16x32xi32>
    %3 = arith.muli %0, %2 : vector<16x32xi32>
    %c0_i32 = arith.constant 0 : i32
    %4 = vector.broadcast %c0_i32 : i32 to vector<16x32xi32>
    %5 = arith.addi %3, %4 : vector<16x32xi32>
    %6 = arith.cmpi eq, %1, %5 : vector<16x32xi32>
    %7 = arith.extui %6 : vector<16x32xi1> to vector<16x32xi32>
    %8 = arith.sitofp %7 : vector<16x32xi32> to vector<16x32xf32>
    %c0 = arith.constant 0 : index
    %c0_0 = arith.constant 0 : index
    %c0_1 = arith.constant 0 : index
    %c0_2 = arith.constant 0 : index
    %c0_3 = arith.constant 0 : index
    %9 = vector.load %arg2[%c0, %c0_0, %c0_1, %c0_2, %c0_3] : memref<1x2x2x16x16xf32, #tpu.memory_space<vmem>>, vector<1x2x1x16x16xf32>
    %10 = vector.shape_cast %9 : vector<1x2x1x16x16xf32> to vector<2x16x16xf32>
    %11 = vector.shape_cast %10 : vector<2x16x16xf32> to vector<32x16xf32>
    %cst = arith.constant dense<0.000000e+00> : vector<32x32xf32>
    %12 = tpu.matmul %11, %8, %cst {dimension_numbers = #tpu.dot_dimension_numbers<[1], [0], [0], [1], [0, 0, 1, 1], [], []>} : vector<32x16xf32>, vector<16x32xf32>, vector<32x32xf32> -> vector<32x32xf32>
    %13 = vector.shape_cast %12 : vector<32x32xf32> to vector<1x2x16x32xf32>
    %c0_4 = arith.constant 0 : index
    %c0_5 = arith.constant 0 : index
    %c0_6 = arith.constant 0 : index
    %c0_7 = arith.constant 0 : index
    %14 = vector.load %arg4[%c0_4, %c0_5, %c0_6, %c0_7] : memref<1x2x16x32xf32, #tpu.memory_space<vmem>>, vector<1x2x16x32xf32>
    tpu.vector_store %arg4[%c0_4, %c0_5, %c0_6, %c0_7], %13 {strides = array<i32>} : memref<1x2x16x32xf32, #tpu.memory_space<vmem>>, vector<1x2x16x32xf32>,
    %c2_i32_8 = arith.constant 2 : i32
    %15 = vector.broadcast %c2_i32_8 : i32 to vector<16x32xi32>
    %16 = arith.muli %0, %15 : vector<16x32xi32>
    %c1_i32 = arith.constant 1 : i32
    %17 = vector.broadcast %c1_i32 : i32 to vector<16x32xi32>
    %18 = arith.addi %16, %17 : vector<16x32xi32>
    %19 = arith.cmpi eq, %1, %18 : vector<16x32xi32>
    %20 = arith.extui %19 : vector<16x32xi1> to vector<16x32xi32>
    %21 = arith.sitofp %20 : vector<16x32xi32> to vector<16x32xf32>
    %c0_9 = arith.constant 0 : index
    %c0_10 = arith.constant 0 : index
    %c1 = arith.constant 1 : index
    %c0_11 = arith.constant 0 : index
    %c0_12 = arith.constant 0 : index
    %22 = vector.load %arg2[%c0_9, %c0_10, %c1, %c0_11, %c0_12] : memref<1x2x2x16x16xf32, #tpu.memory_space<vmem>>, vector<1x2x1x16x16xf32>
    %23 = vector.shape_cast %22 : vector<1x2x1x16x16xf32> to vector<2x16x16xf32>
    %24 = vector.shape_cast %23 : vector<2x16x16xf32> to vector<32x16xf32>
    %cst_13 = arith.constant dense<0.000000e+00> : vector<32x32xf32>
    %25 = tpu.matmul %24, %21, %cst_13 {dimension_numbers = #tpu.dot_dimension_numbers<[1], [0], [0], [1], [0, 0, 1, 1], [], []>} : vector<32x16xf32>, vector<16x32xf32>, vector<32x32xf32> -> vector<32x32xf32>
    %26 = vector.shape_cast %25 : vector<32x32xf32> to vector<1x2x16x32xf32>
    %c0_14 = arith.constant 0 : index
    %c0_15 = arith.constant 0 : index
    %c0_16 = arith.constant 0 : index
    %c0_17 = arith.constant 0 : index
    %27 = vector.load %arg4[%c0_14, %c0_15, %c0_16, %c0_17] : memref<1x2x16x32xf32, #tpu.memory_space<vmem>>, vector<1x2x16x32xf32>
    %28 = arith.addf %27, %26 : vector<1x2x16x32xf32>
    %c0_18 = arith.constant 0 : index
    %c0_19 = arith.constant 0 : index
    %c0_20 = arith.constant 0 : index
    %c0_21 = arith.constant 0 : index
    %29 = vector.load %arg4[%c0_18, %c0_19, %c0_20, %c0_21] : memref<1x2x16x32xf32, #tpu.memory_space<vmem>>, vector<1x2x16x32xf32>
    tpu.vector_store %arg4[%c0_18, %c0_19, %c0_20, %c0_21], %28 {strides = array<i32>} : memref<1x2x16x32xf32, #tpu.memory_space<vmem>>, vector<1x2x16x32xf32>,
    %c0_i32_22 = arith.constant 0 : i32
    %30 = arith.index_cast %c0_i32_22 : i32 to index
    %c0_23 = arith.constant 0 : index
    %c0_24 = arith.constant 0 : index
    %c0_25 = arith.constant 0 : index
    %31 = vector.load %arg4[%30, %c0_23, %c0_24, %c0_25] : memref<1x2x16x32xf32, #tpu.memory_space<vmem>>, vector<1x1x16x32xf32>
    %32 = vector.shape_cast %31 : vector<1x1x16x32xf32> to vector<16x32xf32>
    %c0_26 = arith.constant 0 : index
    %33 = arith.index_cast %c0_i32_22 : i32 to index
    %c0_27 = arith.constant 0 : index
    %c0_28 = arith.constant 0 : index
    %34 = vector.load %arg3[%c0_26, %33, %c0_27, %c0_28] : memref<1x1x16x64xf32, #tpu.memory_space<vmem>>, vector<1x1x16x32xf32>
    %35 = vector.shape_cast %34 : vector<1x1x16x32xf32> to vector<16x32xf32>
    %36 = vector.shape_cast %32 : vector<16x32xf32> to vector<1x1x16x32xf32>
    tpu.vector_store %arg3[%c0_26, %33, %c0_27, %c0_28], %36 {strides = array<i32>} : memref<1x1x16x64xf32, #tpu.memory_space<vmem>>, vector<1x1x16x32xf32>,
    %37 = arith.index_cast %c0_i32_22 : i32 to index
    %c1_29 = arith.constant 1 : index
    %c0_30 = arith.constant 0 : index
    %c0_31 = arith.constant 0 : index
    %38 = vector.load %arg4[%37, %c1_29, %c0_30, %c0_31] : memref<1x2x16x32xf32, #tpu.memory_space<vmem>>, vector<1x1x16x32xf32>
    %39 = vector.shape_cast %38 : vector<1x1x16x32xf32> to vector<16x32xf32>
    %c0_32 = arith.constant 0 : index
    %40 = arith.index_cast %c0_i32_22 : i32 to index
    %c0_33 = arith.constant 0 : index
    %c32 = arith.constant 32 : index
    %41 = vector.load %arg3[%c0_32, %40, %c0_33, %c32] : memref<1x1x16x64xf32, #tpu.memory_space<vmem>>, vector<1x1x16x32xf32>
    %42 = vector.shape_cast %41 : vector<1x1x16x32xf32> to vector<16x32xf32>
    %43 = vector.shape_cast %39 : vector<16x32xf32> to vector<1x1x16x32xf32>
    tpu.vector_store %arg3[%c0_32, %40, %c0_33, %c32], %43 {strides = array<i32>} : memref<1x1x16x64xf32, #tpu.memory_space<vmem>>, vector<1x1x16x32xf32>,
    %c1_i32_34 = arith.constant 1 : i32
    return
  }
  func.func @transform_0(%arg0: i32, %arg1: i32) -> (i32, i32, i32, i32, i32) {
    %c0_i32 = arith.constant 0 : i32
    %c0_i32_0 = arith.constant 0 : i32
    %c0_i32_1 = arith.constant 0 : i32
    %c0_i32_2 = arith.constant 0 : i32
    return %arg0, %arg1, %c0_i32, %c0_i32_0, %c0_i32_1 : i32, i32, i32, i32, i32
  }
  func.func @transform_1(%arg0: i32, %arg1: i32) -> (i32, i32, i32, i32) {
    %c0_i32 = arith.constant 0 : i32
    %c0_i32_0 = arith.constant 0 : i32
    %c0_i32_1 = arith.constant 0 : i32
    return %arg0, %arg1, %c0_i32, %c0_i32_0 : i32, i32, i32, i32
  }
}

</mosaic_0001>

<llo_original>
// kernel: tpu_custom_call.1
$region0: #{tpu_custom_call.1}
  #allocation0 [shape = 'u32[]', space=smem, size = 0x4, offset = 0x4, fixed_abs, tag = 'smem constant byte address 0x4 - core index']
  #allocation1 [shape = 'u32[144,128]{1,0:T(1,128)}', space=vmem, size = 0x12000, scoped, tag = 'internal scratch']
  #allocation2 [shape = 'f32[1,2,16,32]{3,2,1,0:T(8,128)}', space=vmem, size = 0x4000, scoped, tag = 'scratch operand']
  %s0 = inlined_call_operand.hbm [shape: f32[2,2,2,16,16], index: 0, kind: input, shape index: {}]
  %s1 = inlined_call_operand.hbm [shape: f32[2,1,16,64], index: 1, kind: output, shape index: {}]
  %s2 = sld [smem:[#allocation0]]
  $region41: #{tpu_custom_call.1} parent=0
    _
  %s4 = ssub.s32 1, %s2
  %s5 = scalar_select 0, %s4, %s2
  $region1: #{tpu_custom_call.1} parent=0
    #allocation3 [shape = 'u8[65536]{0}', space=vmem, size = 0x10000, scoped, tag = 'input window, operand 0']
    #allocation4 [shape = 's32[2]{0}', space=sflag, size = 0x8, scoped, tag = 'scoped memory for tpu_custom_call.1']
    #allocation5 [shape = 's32[2]{0}', space=sflag, size = 0x8, scoped, tag = 'scoped memory for tpu_custom_call.1']
    #allocation6 [shape = 'u8[16384]{0}', space=vmem, size = 0x4000, scoped, tag = 'output window, operand 0']
    %6 = vsyncpa [#allocation4], 0
    %s7 = scalar_lea.sflag [#allocation4], 1
    %8 = vsyncpa %s7, 0
    %9 = vsyncpa [#allocation5], 0
    %s10 = scalar_lea.sflag [#allocation5], 1
    %11 = vsyncpa %s10, 0
    loop: start=0, step=1, limit=4
    $region2: #{tpu_custom_call.1} parent=1 // loop_pre_header
      _
    $region3: #{tpu_custom_call.1} parent=1 // loop_header
      %s13 = sphi 0, %s17
      %p14 = scmp.ge.s32.totalorder %s13, 4
      %s20 = sphi 0, %s32
      %s21 = sphi 0, %s28
      %s22 = sphi 0, %s20
      %s23 = sphi 0, %s21
      %s24 = sphi 0, %s22
      %s25 = sphi 0, %s23
      %s37 = sphi 0, %s39
      %s40 = sphi 0, %s37
      %s41 = sphi 0, %s40
      %s57 = sphi 0, %s41
      %s65 = sphi 0, %s67
      %s68 = sphi 0, %s65
      %s69 = sphi 0, %s68
      %s85 = sphi 0, %s69
    $region4: #{tpu_custom_call.1} parent=1 // loop_header_branch
      %16 = sbr.rel (%p14) target = $region8
    $region5: #{tpu_custom_call.1} parent=1 // loop_body
      %s18 = ssub.s32 %s13, 1
      %s19 = ssub.s32 %s13, 2
      %s26 = sadd.s32 1, %s21
      %p27 = scmp.ge.s32.totalorder %s26, 1
      %s28 = scalar_select %p27, 0, %s26
      %s29 = sadd.s32 1, %s20
      %s30 = scalar_select %p27, %s29, %s20
      %p31 = scmp.ge.s32.totalorder %s30, 2
      %s32 = scalar_select %p31, 0, %s30
      %s33 = ssub.s32 %s20, %s32
      %s34 = ssub.s32 %s21, %s28
      %s35 = sor.u32 %s33, %s34
      %p36 = scmp.eq.s32.totalorder %s35, 0
      %s38 = sadd.s32 %s37, 1
      %s39 = scalar_select %p36, %s37, %s38
      %p42 = pneg %p36
      %p43 = scmp.eq.s32.totalorder %s13, 1
      %p44 = por %p42, %p43
      %p45 = scmp.ne.s32.totalorder %s37, %s40
      %p46 = scmp.eq.s32.totalorder %s13, 0
      %p47 = por %p45, %p46
      %p48 = scmp.ne.s32.totalorder %s37, %s40
      %p49 = scmp.eq.s32.totalorder %s18, 1
      %p50 = por %p48, %p49
      %p51 = scmp.ne.s32.totalorder %s40, %s41
      %p52 = scmp.eq.s32.totalorder %s18, 0
      %p53 = por %p51, %p52
      %p54 = scmp.ne.s32.totalorder %s40, %s41
      %p55 = scmp.eq.s32.totalorder %s19, 1
      %p56 = por %p54, %p55
      %p58 = scmp.ne.s32.totalorder %s41, %s57
      %p59 = scmp.eq.s32.totalorder %s19, 0
      %p60 = por %p58, %p59
      %s61 = ssub.s32 %s20, %s32
      %s62 = ssub.s32 %s21, %s28
      %s63 = sor.u32 %s61, %s62
      %p64 = scmp.eq.s32.totalorder %s63, 0
      %s66 = sadd.s32 %s65, 1
      %s67 = scalar_select %p64, %s65, %s66
      %p70 = pneg %p64
      %p71 = scmp.eq.s32.totalorder %s13, 1
      %p72 = por %p70, %p71
      %p73 = scmp.ne.s32.totalorder %s65, %s68
      %p74 = scmp.eq.s32.totalorder %s13, 0
      %p75 = por %p73, %p74
      %p76 = scmp.ne.s32.totalorder %s65, %s68
      %p77 = scmp.eq.s32.totalorder %s18, 1
      %p78 = por %p76, %p77
      %p79 = scmp.ne.s32.totalorder %s68, %s69
      %p80 = scmp.eq.s32.totalorder %s18, 0
      %p81 = por %p79, %p80
      %p82 = scmp.ne.s32.totalorder %s68, %s69
      %p83 = scmp.eq.s32.totalorder %s19, 1
      %p84 = por %p82, %p83
      %p86 = scmp.ne.s32.totalorder %s69, %s85
      %p87 = scmp.eq.s32.totalorder %s19, 0
      %p88 = por %p86, %p87
      %p89 = scmp.le.s32.totalorder 1, %s13
      %p90 = scmp.lt.s32.totalorder %s13, 3
      %p91 = pnand %p89, %p90
      %p92 = pneg %p91
      // Predicated region
      $region9: #{tpu_custom_call.1} parent=5 // pred_check
        _
      $region10: #{tpu_custom_call.1} parent=5 // pred_check_branch
        %94 = sbr.rel (%p91) target = $region12
      $region11: #{tpu_custom_call.1} parent=5 // pred_region
        %s95 = ssub.s32 %s13, 1
      $region12: #{tpu_custom_call.1} parent=5 // pred_fallthru
        _
      %p96 = scmp.lt.s32.totalorder %s13, 2
      // Predicated region
      $region13: #{tpu_custom_call.1} parent=5 // pred_check
        %p97 = pneg %p96
      $region14: #{tpu_custom_call.1} parent=5 // pred_check_branch
        %99 = sbr.rel (%p97) target = $region16
      $region15: #{tpu_custom_call.1} parent=5 // pred_region
        // Predicated region
        $region17: #{tpu_custom_call.1} parent=15 // pred_check
          %p100 = pneg %p47
        $region18: #{tpu_custom_call.1} parent=15 // pred_check_branch
          %102 = sbr.rel (%p100) target = $region20
        $region19: #{tpu_custom_call.1} parent=15 // pred_region
          %s103 = sand.u32 %s37, 1
          %s104 = scalar_lea.sflag [#allocation4], %s103
          %s105 = sand.u32 %s37, 1
          %s106 = smul.addr %s105, 64
          %s107 = scalar_lea.vmem [#allocation3], %s106
          %s108 = smul.u32 2, %s21
          %s110 = ssub.s32 1024, 1024
          %111 = vsyncadd %s104, %s110
          %s112 = smul.addr %s108, 4
          %s113 = smul.addr %s20, 8
          %s114 = sadd.s32 %s112, %s113
          %s115 = smul.addr %s114, 128
          %s116 = scalar_lea.hbm %s0, %s115
          %s117 = sshll.u32 %s107, 4
          %s118 = int_to_ptr.vmem [resolvable:$true] %s117
          %123 = dma.hbm_to_vmem [thread:$0]  %s116, 1024, %s118, %s104, 128, 128, 8
        $region20: #{tpu_custom_call.1} parent=15 // pred_fallthru
          _
      $region16: #{tpu_custom_call.1} parent=5 // pred_fallthru
        _
      %p124 = scmp.le.s32.totalorder 1, %s13
      %p125 = scmp.lt.s32.totalorder %s13, 3
      %p126 = pnand %p124, %p125
      %p127 = pneg %p126
      // Predicated region
      $region21: #{tpu_custom_call.1} parent=5 // pred_check
        _
      $region22: #{tpu_custom_call.1} parent=5 // pred_check_branch
        %129 = sbr.rel (%p126) target = $region24
      $region23: #{tpu_custom_call.1} parent=5 // pred_region
        %s130 = ssub.s32 %s13, 1
        %s131 = sand.u32 %s40, 1
        %s132 = scalar_lea.sflag [#allocation4], %s131
        %s133 = sand.u32 %s40, 1
        %s134 = smul.addr %s133, 64
        %s135 = scalar_lea.vmem [#allocation3], %s134
        // Predicated region
        $region25: #{tpu_custom_call.1} parent=23 // pred_check
          %p136 = pneg %p53
        $region26: #{tpu_custom_call.1} parent=23 // pred_check_branch
          %138 = sbr.rel (%p136) target = $region28
        $region27: #{tpu_custom_call.1} parent=23 // pred_region
          %139 = dma.done %s132, 1024
        $region28: #{tpu_custom_call.1} parent=23 // pred_fallthru
          _
        %s140 = sand.u32 %s40, 1
        %s141 = scalar_lea.sflag [#allocation4], %s140
        %s142 = sand.u32 %s40, 1
        %s143 = smul.addr %s142, 64
        %s144 = scalar_lea.vmem [#allocation3], %s143
        %p145 = pneg %p53
        %p146 = pneg %p50
        %p147 = pneg %p81
        %p148 = pneg %p78
        %s149 = sand.u32 %s68, 1
        %s150 = scalar_lea.sflag [#allocation5], %s149
        %s151 = sand.u32 %s68, 1
        %s152 = smul.addr %s151, 16
        %s153 = scalar_lea.vmem [#allocation6], %s152
        %s154 = smul.u32 2, %s23
        %v155 = vlaneseq
        %v156 = vshrl.u32 %v155, 7
        %v157 = vadd.s32 %v156, 8
        %v158 = vlaneseq
        %v159 = vand.u32 %v158, 127
        %v160 = vmul.u32 %v156, 2
        %v161 = vmul.u32 %v157, 2
        %vm162 = vcmp.eq.s32.totalorder %v159, %v160
        %vm163 = vcmp.eq.s32.totalorder %v159, %v161
        %v164 = vsel %vm162, 1, 0
        %v165 = vsel %vm163, 1, 0
        %v166 = vcvt.s32.f32 %v164
        %v167 = vcvt.s32.f32 %v165
        %v168 = vld [vmem:[%s135] sm:$0xff]
        %v169 = vld [vmem:[%s135 + $0x8] sm:$0xff]
        %v170 = vld [vmem:[%s135 + $0x20] sm:$0xff]
        %v171 = vld [vmem:[%s135 + $0x28] sm:$0xff]
        %vm172 = vcmask 130048
        %v174 = vsel %vm172, %v168, 0
        %v177 = vsel %vm172, %v169, 0
        %v180 = vsel %vm172, %v170, 0
        %v183 = vsel %vm172, %v171, 0
        %185 = vmatprep.subr.mxu0 0.0
        %186 = vmatpush1.msra.mxu0 %v166
        %187 = vmatprep.subr.mxu0 0.0
        %188 = vmatpush1.msra.mxu0 %v167
        %189 = vmatprep.subr.mxu0 0.0
        %190 = vmatpush1.msra.mxu0 0.0
        %191 = vmatprep.subr.mxu0 0.0
        %192 = vmatpush1.msra.mxu0 0.0
        %193 = vmatprep.subr.mxu0 0.0
        %194 = vmatpush1.msra.mxu0 0.0
        %195 = vmatprep.subr.mxu0 0.0
        %196 = vmatpush1.msra.mxu0 0.0
        %197 = vmatprep.subr.mxu0 0.0
        %198 = vmatpush1.msra.mxu0 0.0
        %199 = vmatprep.subr.mxu0 0.0
        %200 = vmatpush1.msra.mxu0 0.0
        %201 = vmatprep.subr.mxu0 0.0
        %202 = vmatpush1.msra.mxu0 0.0
        %203 = vmatprep.subr.mxu0 0.0
        %204 = vmatpush1.msra.mxu0 0.0
        %205 = vmatprep.subr.mxu0 0.0
        %206 = vmatpush1.msra.mxu0 0.0
        %207 = vmatprep.subr.mxu0 0.0
        %208 = vmatpush1.msra.mxu0 0.0
        %209 = vmatprep.subr.mxu0 0.0
        %210 = vmatpush1.msra.mxu0 0.0
        %211 = vmatprep.subr.mxu0 0.0
        %212 = vmatpush1.msra.mxu0 0.0
        %213 = vmatprep.subr.mxu0 0.0
        %214 = vmatpush1.msra.mxu0 0.0
        %215 = vmatprep.subr.mxu0 0.0
        %216 = vmatpush1.msra.mxu0 0.0
        %217 = vmatprep.subr.mxu0 0.0
        %218 = vmatpush1.msra.mxu0 0.0
        %219 = vmatprep.subr.mxu0 0.0
        %220 = vmatpush1.msra.mxu0 0.0
        %221 = vmatprep.subr.mxu0 0.0
        %222 = vmatpush1.msra.mxu0 0.0
        %223 = vmatprep.subr.mxu0 0.0
        %224 = vmatpush1.msra.mxu0 0.0
        %225 = vmatprep.subr.mxu0 0.0
        %226 = vmatpush1.msra.mxu0 0.0
        %227 = vmatprep.subr.mxu0 0.0
        %228 = vmatpush1.msra.mxu0 0.0
        %229 = vmatprep.subr.mxu0 0.0
        %230 = vmatpush1.msra.mxu0 0.0
        %231 = vmatprep.subr.mxu0 0.0
        %232 = vmatpush1.msra.mxu0 0.0
        %233 = vmatprep.subr.mxu0 0.0
        %234 = vmatpush1.msra.mxu0 0.0
        %235 = vmatprep.subr.mxu0 0.0
        %236 = vmatpush1.msra.mxu0 0.0
        %237 = vmatprep.subr.mxu0 0.0
        %238 = vmatpush1.msra.mxu0 0.0
        %239 = vmatprep.subr.mxu0 0.0
        %240 = vmatpush1.msra.mxu0 0.0
        %241 = vmatprep.subr.mxu0 0.0
        %242 = vmatpush1.msra.mxu0 0.0
        %243 = vmatprep.subr.mxu0 0.0
        %244 = vmatpush1.msra.mxu0 0.0
        %245 = vmatprep.subr.mxu0 0.0
        %246 = vmatpush1.msra.mxu0 0.0
        %247 = vmatprep.subr.mxu0 0.0
        %248 = vmatpush1.msra.mxu0 0.0
        %249 = vmatprep.mubr.f32.mxu0 0.0
        %250 = vmatmul.mubr.f32.gmra.mrb[0].mxu0 %v174
        %v251 = vpop.f32.mrb[0].mxu0
        %v252 = vadd.f32 0.0, %v251
        %v253 = vpop.f32.mrb[0].mxu0
        %254 = vmatprep.mubr.f32.mxu0 0.0
        %255 = vmatmul.mubr.f32.gmra.mrb[0].mxu0 %v177
        %v256 = vpop.f32.mrb[0].mxu0
        %v257 = vadd.f32 0.0, %v256
        %v258 = vpop.f32.mrb[0].mxu0
        %259 = vmatprep.mubr.f32.mxu0 0.0
        %260 = vmatmul.mubr.f32.gmra.mrb[0].mxu0 %v180
        %v261 = vpop.f32.mrb[0].mxu0
        %v262 = vadd.f32 0.0, %v261
        %v263 = vpop.f32.mrb[0].mxu0
        %264 = vmatprep.mubr.f32.mxu0 0.0
        %265 = vmatmul.mubr.f32.gmra.mrb[0].mxu0 %v183
        %v266 = vpop.f32.mrb[0].mxu0
        %v267 = vadd.f32 0.0, %v266
        %v268 = vpop.f32.mrb[0].mxu0
        %269 = vdwg.mxu0
        %vm270 = vcmask 261120
        %271 = vst.msk [vmem:[#allocation2] sm:$0xff] %vm270, %v252
        %272 = vst.msk [vmem:[#allocation2 + $0x8] sm:$0xff] %vm270, %v257
        %273 = vst.msk [vmem:[#allocation2 + $0x10] sm:$0xff] %vm270, %v262
        %274 = vst.msk [vmem:[#allocation2 + $0x18] sm:$0xff] %vm270, %v267
        %v275 = vadd.s32 %v160, 1
        %v276 = vadd.s32 %v161, 1
        %vm277 = vcmp.eq.s32.totalorder %v159, %v275
        %vm278 = vcmp.eq.s32.totalorder %v159, %v276
        %v279 = vsel %vm277, 1, 0
        %v280 = vsel %vm278, 1, 0
        %v281 = vcvt.s32.f32 %v279
        %v282 = vcvt.s32.f32 %v280
        %s283 = scalar_lea.vmem %s135, 16 [#allocation3]
        %v284 = vld [vmem:[%s283] sm:$0xff]
        %v285 = vld [vmem:[%s283 + $0x8] sm:$0xff]
        %v286 = vld [vmem:[%s283 + $0x20] sm:$0xff]
        %v287 = vld [vmem:[%s283 + $0x28] sm:$0xff]
        %v289 = vsel %vm172, %v284, 0
        %v292 = vsel %vm172, %v285, 0
        %v295 = vsel %vm172, %v286, 0
        %v298 = vsel %vm172, %v287, 0
        %300 = vmatprep.subr.mxu0 0.0
        %301 = vmatpush1.msra.mxu0 %v281
        %302 = vmatprep.subr.mxu0 0.0
        %303 = vmatpush1.msra.mxu0 %v282
        %304 = vmatprep.subr.mxu0 0.0
        %305 = vmatpush1.msra.mxu0 0.0
        %306 = vmatprep.subr.mxu0 0.0
        %307 = vmatpush1.msra.mxu0 0.0
        %308 = vmatprep.subr.mxu0 0.0
        %309 = vmatpush1.msra.mxu0 0.0
        %310 = vmatprep.subr.mxu0 0.0
        %311 = vmatpush1.msra.mxu0 0.0
        %312 = vmatprep.subr.mxu0 0.0
        %313 = vmatpush1.msra.mxu0 0.0
        %314 = vmatprep.subr.mxu0 0.0
        %315 = vmatpush1.msra.mxu0 0.0
        %316 = vmatprep.subr.mxu0 0.0
        %317 = vmatpush1.msra.mxu0 0.0
        %318 = vmatprep.subr.mxu0 0.0
        %319 = vmatpush1.msra.mxu0 0.0
        %320 = vmatprep.subr.mxu0 0.0
        %321 = vmatpush1.msra.mxu0 0.0
        %322 = vmatprep.subr.mxu0 0.0
        %323 = vmatpush1.msra.mxu0 0.0
        %324 = vmatprep.subr.mxu0 0.0
        %325 = vmatpush1.msra.mxu0 0.0
        %326 = vmatprep.subr.mxu0 0.0
        %327 = vmatpush1.msra.mxu0 0.0
        %328 = vmatprep.subr.mxu0 0.0
        %329 = vmatpush1.msra.mxu0 0.0
        %330 = vmatprep.subr.mxu0 0.0
        %331 = vmatpush1.msra.mxu0 0.0
        %332 = vmatprep.subr.mxu0 0.0
        %333 = vmatpush1.msra.mxu0 0.0
        %334 = vmatprep.subr.mxu0 0.0
        %335 = vmatpush1.msra.mxu0 0.0
        %336 = vmatprep.subr.mxu0 0.0
        %337 = vmatpush1.msra.mxu0 0.0
        %338 = vmatprep.subr.mxu0 0.0
        %339 = vmatpush1.msra.mxu0 0.0
        %340 = vmatprep.subr.mxu0 0.0
        %341 = vmatpush1.msra.mxu0 0.0
        %342 = vmatprep.subr.mxu0 0.0
        %343 = vmatpush1.msra.mxu0 0.0
        %344 = vmatprep.subr.mxu0 0.0
        %345 = vmatpush1.msra.mxu0 0.0
        %346 = vmatprep.subr.mxu0 0.0
        %347 = vmatpush1.msra.mxu0 0.0
        %348 = vmatprep.subr.mxu0 0.0
        %349 = vmatpush1.msra.mxu0 0.0
        %350 = vmatprep.subr.mxu0 0.0
        %351 = vmatpush1.msra.mxu0 0.0
        %352 = vmatprep.subr.mxu0 0.0
        %353 = vmatpush1.msra.mxu0 0.0
        %354 = vmatprep.subr.mxu0 0.0
        %355 = vmatpush1.msra.mxu0 0.0
        %356 = vmatprep.subr.mxu0 0.0
        %357 = vmatpush1.msra.mxu0 0.0
        %358 = vmatprep.subr.mxu0 0.0
        %359 = vmatpush1.msra.mxu0 0.0
        %360 = vmatprep.subr.mxu0 0.0
        %361 = vmatpush1.msra.mxu0 0.0
        %362 = vmatprep.subr.mxu0 0.0
        %363 = vmatpush1.msra.mxu0 0.0
        %364 = vmatprep.mubr.f32.mxu0 0.0
        %365 = vmatmul.mubr.f32.gmra.mrb[0].mxu0 %v289
        %v366 = vpop.f32.mrb[0].mxu0
        %v367 = vadd.f32 0.0, %v366
        %v368 = vpop.f32.mrb[0].mxu0
        %369 = vmatprep.mubr.f32.mxu0 0.0
        %370 = vmatmul.mubr.f32.gmra.mrb[0].mxu0 %v292
        %v371 = vpop.f32.mrb[0].mxu0
        %v372 = vadd.f32 0.0, %v371
        %v373 = vpop.f32.mrb[0].mxu0
        %374 = vmatprep.mubr.f32.mxu0 0.0
        %375 = vmatmul.mubr.f32.gmra.mrb[0].mxu0 %v295
        %v376 = vpop.f32.mrb[0].mxu0
        %v377 = vadd.f32 0.0, %v376
        %v378 = vpop.f32.mrb[0].mxu0
        %379 = vmatprep.mubr.f32.mxu0 0.0
        %380 = vmatmul.mubr.f32.gmra.mrb[0].mxu0 %v298
        %v381 = vpop.f32.mrb[0].mxu0
        %v382 = vadd.f32 0.0, %v381
        %v383 = vpop.f32.mrb[0].mxu0
        %384 = vdwg.mxu0
        %v385 = vld [vmem:[#allocation2] sm:$0xff]
        %v386 = vld [vmem:[#allocation2 + $0x8] sm:$0xff]
        %v387 = vld [vmem:[#allocation2 + $0x10] sm:$0xff]
        %v388 = vld [vmem:[#allocation2 + $0x18] sm:$0xff]
        %v389 = vadd.f32 %v385, %v367
        %v390 = vadd.f32 %v386, %v372
        %v391 = vadd.f32 %v387, %v377
        %v392 = vadd.f32 %v388, %v382
        %393 = vst.msk [vmem:[#allocation2] sm:$0xff] %vm270, %v389
        %394 = vst.msk [vmem:[#allocation2 + $0x8] sm:$0xff] %vm270, %v390
        %395 = vst.msk [vmem:[#allocation2 + $0x10] sm:$0xff] %vm270, %v391
        %396 = vst.msk [vmem:[#allocation2 + $0x18] sm:$0xff] %vm270, %v392
        %v397 = vld [vmem:[#allocation2] sm:$0xff]
        %v398 = vld [vmem:[#allocation2 + $0x8] sm:$0xff]
        %399 = vst.msk [vmem:[%s153] sm:$0xff] %vm270, %v397
        %400 = vst.msk [vmem:[%s153 + $0x8] sm:$0xff] %vm270, %v398
        %s401 = scalar_lea.vmem [#allocation2], 16
        %v402 = vld [vmem:[%s401] sm:$0xff]
        %v403 = vld [vmem:[%s401 + $0x8] sm:$0xff]
        %406 = vrot.lane.b32.xlu0 %v402, 32
        %v407 = vpop.permute.xlu0 %406
        %408 = vrot.lane.b32.xlu0 %v403, 32
        %v409 = vpop.permute.xlu0 %408
        %vm412 = vcmask 523520
        %413 = vst.msk [vmem:[%s153] sm:$0xff] %vm412, %v407
        %414 = vst.msk [vmem:[%s153 + $0x8] sm:$0xff] %vm412, %v409
        %s415 = sand.u32 %s68, 1
        %s416 = scalar_lea.sflag [#allocation5], %s415
        %s417 = sand.u32 %s68, 1
        %s418 = smul.addr %s417, 16
        %s419 = scalar_lea.vmem [#allocation6], %s418
        // Predicated region
        $region29: #{tpu_custom_call.1} parent=23 // pred_check
          %p420 = pneg %p78
        $region30: #{tpu_custom_call.1} parent=23 // pred_check_branch
          %422 = sbr.rel (%p420) target = $region32
        $region31: #{tpu_custom_call.1} parent=23 // pred_region
          %s424 = ssub.s32 256, 256
          %425 = vsyncadd %s416, %s424
          %s426 = smul.addr %s23, 2
          %s427 = smul.addr %s22, 2
          %s428 = sadd.s32 %s426, %s427
          %s429 = smul.addr %s428, 128
          %s430 = scalar_lea.hbm %s1, %s429
          %s431 = sshll.u32 %s419, 4
          %s432 = int_to_ptr.vmem [resolvable:$true] %s431
          %437 = dma.vmem_to_hbm [thread:$0]  %s432, 256, %s430, %s416, 128, 128, 8
        $region32: #{tpu_custom_call.1} parent=23 // pred_fallthru
          _
      $region24: #{tpu_custom_call.1} parent=5 // pred_fallthru
        _
      %p438 = scmp.le.s32.totalorder 2, %s13
      // Predicated region
      $region33: #{tpu_custom_call.1} parent=5 // pred_check
        %p439 = pneg %p438
      $region34: #{tpu_custom_call.1} parent=5 // pred_check_branch
        %441 = sbr.rel (%p439) target = $region36
      $region35: #{tpu_custom_call.1} parent=5 // pred_region
        %s442 = ssub.s32 %s13, 2
        // Predicated region
        $region37: #{tpu_custom_call.1} parent=35 // pred_check
          %p443 = pneg %p84
        $region38: #{tpu_custom_call.1} parent=35 // pred_check_branch
          %445 = sbr.rel (%p443) target = $region40
        $region39: #{tpu_custom_call.1} parent=35 // pred_region
          %s446 = sand.u32 %s69, 1
          %s447 = scalar_lea.sflag [#allocation5], %s446
          %s448 = sand.u32 %s69, 1
          %s449 = smul.addr %s448, 16
          %s450 = scalar_lea.vmem [#allocation6], %s449
          %451 = dma.done %s447, 256
        $region40: #{tpu_custom_call.1} parent=35 // pred_fallthru
          _
      $region36: #{tpu_custom_call.1} parent=5 // pred_fallthru
        _
    $region6: #{tpu_custom_call.1} parent=1 // loop_footer
      %s17 = sadd.s32 1, %s13
    $region7: #{tpu_custom_call.1} parent=1 // loop_footer_branch
      %12 = sbr.rel target = $region3
    $region8: #{tpu_custom_call.1} parent=1 // loop_exit
      _
    %452 = vsyncpa [#allocation4], 1
    %s453 = scalar_lea.sflag [#allocation4], 1
    %454 = vsyncpa %s453, 1
    %455 = vsyncpa [#allocation5], 1
    %s456 = scalar_lea.sflag [#allocation5], 1
    %457 = vsyncpa %s456, 1

</llo_original>
